<compile_context>
chip_gen: v7x
topology: tpu7x:2x2x1
jax: 0.10.0
libtpu: 0.0.40
codegen_flags: <defaults>
</compile_context>

<pallas_src>
import functools

import jax
import jax.numpy as jnp
from jax.experimental import pallas as pl
from jax.experimental.pallas import tpu as pltpu


def _spatial_se_kernel(x_ref, w_ref, b_ref, o_ref, *, c_chunk):
    # x_ref: (BN, C, THW) input tile, lane-dense last dim
    # w_ref: (C, 1)       1x1-conv weight, f32 (same block every step -> resident)
    # b_ref: (1, 1)       conv bias, f32 SMEM scalar
    # o_ref: (BN, C, THW) output tile
    C = x_ref.shape[1]

    # Channel-chunked f32 accumulate: avoids a full-block broadcast temporary and
    # keeps the squeeze accumulation in float32 regardless of the input dtype.
    z = None
    for c0 in range(0, C, c_chunk):
        c1 = min(c0 + c_chunk, C)
        xc = x_ref[:, c0:c1, :].astype(jnp.float32)          # (BN, cc, THW)
        wc = w_ref[c0:c1, :]                                  # (cc, 1) f32
        part = jnp.sum(xc * wc[None, :, :], axis=1, keepdims=True)
        z = part if z is None else z + part                   # (BN, 1, THW) f32

    s = jax.nn.sigmoid(z + b_ref[0, 0])                       # spatial squeeze map (EUP)
    s = s.astype(o_ref.dtype)
    o_ref[...] = (x_ref[...] * s).astype(o_ref.dtype)         # excite all channels (VPU)


def _chip_defaults():
    """(target_block_bytes, vmem_limit_bytes_or_None, min_grid_steps) per TPU generation."""
    kind = ""
    try:
        kind = jax.devices()[0].device_kind.lower()
    except Exception:
        pass
    if "v7" in kind:
        # 3.2 TB/s HBM, 64 MiB physical VMEM: bigger blocks, explicit scoped-VMEM raise,
        # and enough grid steps to feed both TensorCores.
        return 4 * 1024 * 1024, 48 * 1024 * 1024, 8
    if "v6" in kind:
        return 3 * 1024 * 1024, None, 4
    # v5e (and unknown): 16 MiB default scoped VMEM -> stay conservative.
    return 2 * 1024 * 1024, None, 4


def _largest_divisor_leq(n, cap):
    cap = max(1, min(n, cap))
    for d in range(cap, 0, -1):
        if n % d == 0:
            return d
    return 1


def _choose_tiling(B, C_pad, HW_pad, itemsize, target_block_bytes, min_grid_steps):
    """Pick (bn, thw): bn batch slabs per block, thw lanes (divisor of HW_pad, mult of 128)."""
    n128 = HW_pad // 128
    slab_bytes = C_pad * HW_pad * itemsize            # one sublane-padded batch slab

    if slab_bytes <= target_block_bytes:
        thw = HW_pad
        bn = max(1, min(B, target_block_bytes // slab_bytes))
        while B % bn:
            bn -= 1
    else:
        bn = 1
        d_max = max(1, target_block_bytes // (128 * C_pad * itemsize))
        thw = 128 * _largest_divisor_leq(n128, d_max)

    # Guarantee enough grid steps for megacore sharding / DMA-compute overlap.
    def steps(bn_, thw_):
        return (B // bn_) * (HW_pad // thw_)

    want = min(min_grid_steps, B * n128)
    while steps(bn, thw) < want and bn > 1:
        bn -= 1
        while B % bn:
            bn -= 1
    while steps(bn, thw) < want and thw > 128:
        d = thw // 128
        thw = 128 * _largest_divisor_leq(n128, d - 1)

    return bn, thw


def spatial_se_layer(x, conv_weight, conv_bias, weights=None, *,
                     target_block_bytes=None, donate_input=False):
    """x: (B, C, H, W); conv_weight: (1, C, 1, 1); conv_bias: (1,); weights: optional few-shot."""
    B, C, H, W = x.shape

    if weights is not None:
        # Few-shot branch: kernel = mean(weights, dim=0), no bias (tiny O(C) op, wrapper-side).
        w_vec = jnp.mean(weights, axis=0).reshape(C)
        b_val = jnp.zeros((), dtype=jnp.float32)
    else:
        w_vec = conv_weight.reshape(C)
        b_val = conv_bias.reshape(())

    tgt_default, vmem_limit, min_grid_steps = _chip_defaults()
    if target_block_bytes is None:
        target_block_bytes = tgt_default

    HW = H * W
    HW_pad = ((HW + 127) // 128) * 128                 # lane-dense 128-multiple spatial dim
    x2 = x.reshape(B, C, HW)
    if HW_pad != HW:
        x2 = jnp.pad(x2, ((0, 0), (0, 0), (0, HW_pad - HW)))

    w_col = w_vec.reshape(C, 1).astype(jnp.float32)    # resident f32 conv weight
    b_arr = b_val.reshape(1, 1).astype(jnp.float32)    # f32 SMEM bias scalar

    itemsize = jnp.dtype(x.dtype).itemsize
    sublane = max(1, 32 // itemsize)                   # 8 (f32) / 16 (bf16) / 32 (int8)
    C_pad = ((C + sublane - 1) // sublane) * sublane   # VMEM sublane padding for small C

    bn, thw = _choose_tiling(B, C_pad, HW_pad, itemsize, target_block_bytes,
                             min_grid_steps)
    grid = (B // bn, HW_pad // thw)                    # thw | HW_pad -> no ragged tail

    c_chunk = min(C, 32)                               # bounds the f32 squeeze temporary
    kernel = functools.partial(_spatial_se_kernel, c_chunk=c_chunk)

    io_aliases = {}
    if donate_input and HW_pad == HW:
        io_aliases = {0: 0}                            # overwrite x in place (same bytes read/written)

    out = pl.pallas_call(
        kernel,
        out_shape=jax.ShapeDtypeStruct((B, C, HW_pad), x.dtype),
        grid=grid,
        in_specs=[
            pl.BlockSpec((bn, C, thw), lambda i, j: (i, 0, j)),      # input tile
            pl.BlockSpec((C, 1), lambda i, j: (0, 0)),               # resident conv weight
            pl.BlockSpec(memory_space=pltpu.MemorySpace.SMEM),       # bias scalar in SMEM
        ],
        out_specs=pl.BlockSpec((bn, C, thw), lambda i, j: (i, 0, j)),
        compiler_params=pltpu.CompilerParams(
            dimension_semantics=("parallel", "parallel"),
            vmem_limit_bytes=vmem_limit),
        input_output_aliases=io_aliases,
    )(x2, w_col, b_arr)

    if HW_pad != HW:
        out = out[:, :, :HW]
    return out.reshape(B, C, H, W)


def spatial_se_ref(x, conv_weight, conv_bias, weights=None):
    B, C, H, W = x.shape
    if weights is not None:
        w_vec = jnp.mean(weights, axis=0).reshape(C)
        b_val = jnp.zeros((), dtype=jnp.float32)
    else:
        w_vec = conv_weight.reshape(C)
        b_val = conv_bias.reshape(())
    z = jnp.einsum("bchw,c->bhw", x.astype(jnp.float32), w_vec.astype(jnp.float32)) + b_val
    s = jax.nn.sigmoid(z)[:, None, :, :].astype(x.dtype)
    return x * s


if __name__ == "__main__":
    bt, c, h, w = 2, 4, 16, 16

    key = jax.random.PRNGKey(0)
    kx, kw, kb, kf, ku = jax.random.split(key, 5)
    x = jax.random.normal(kx, (bt, c, h, w), dtype=jnp.float32)
    conv_weight = jax.random.normal(kw, (1, c, 1, 1), dtype=jnp.float32) * 0.1
    conv_bias = jax.random.normal(kb, (1,), dtype=jnp.float32) * 0.1

    # Standard path (self.conv with bias)
    out = spatial_se_layer(x, conv_weight, conv_bias)
    out = jax.block_until_ready(out)
    ref = spatial_se_ref(x, conv_weight, conv_bias)
    assert out.shape == (bt, c, h, w)
    assert jnp.allclose(out, ref, atol=1e-5, rtol=1e-5)

    # Few-shot path (weights averaged over dim 0, no bias)
    few_shot_w = jax.random.normal(kf, (3, c), dtype=jnp.float32) * 0.1
    out2 = spatial_se_layer(x, conv_weight, conv_bias, weights=few_shot_w)
    out2 = jax.block_until_ready(out2)
    ref2 = spatial_se_ref(x, conv_weight, conv_bias, weights=few_shot_w)
    assert jnp.allclose(out2, ref2, atol=1e-5, rtol=1e-5)

    # Unaligned spatial size exercises the HW-padding path (HW=100 -> padded to 128)
    xu = jax.random.normal(ku, (bt, c, 10, 10), dtype=jnp.float32)
    out3 = spatial_se_layer(xu, conv_weight, conv_bias)
    out3 = jax.block_until_ready(out3)
    ref3 = spatial_se_ref(xu, conv_weight, conv_bias)
    assert out3.shape == (bt, c, 10, 10)
    assert jnp.allclose(out3, ref3, atol=1e-5, rtol=1e-5)

    print("KERNEL_OK")
</pallas_src>

<mosaic_0001>
module attributes {stable_mosaic.version = 11 : i64} {
  func.func @_spatial_se_kernel(%arg0: i32, %arg1: i32, %arg2: memref<1x4x128xf32, #tpu.memory_space<vmem>>, %arg3: memref<4x1xf32, #tpu.memory_space<vmem>>, %arg4: memref<1x1xf32, #tpu.memory_space<smem>>, %arg5: memref<1x4x128xf32, #tpu.memory_space<vmem>>) attributes {dimension_semantics = [#tpu.dimension_semantics<parallel>, #tpu.dimension_semantics<parallel>], iteration_bounds = array<i64: 2, 2>, scalar_prefetch = 0 : i64, scratch_operands = 0 : i64, tpu.core_type = #tpu.core_type<tc>, window_params = [{transform_indices = @transform_0, window_bounds = array<i64: 1, 4, 128>}, {pipeline_mode = #tpu.pipeline_mode<synchronous>, transform_indices = @transform_1, window_bounds = array<i64: 4, 1>}, {transform_indices = @transform_2, window_bounds = array<i64: 1, 1>}, {transform_indices = @transform_3, window_bounds = array<i64: 1, 4, 128>}]} {
    %c0 = arith.constant 0 : index
    %c0_0 = arith.constant 0 : index
    %c0_1 = arith.constant 0 : index
    %0 = vector.load %arg2[%c0, %c0_0, %c0_1] : memref<1x4x128xf32, #tpu.memory_space<vmem>>, vector<1x4x128xf32>
    %c0_2 = arith.constant 0 : index
    %c0_3 = arith.constant 0 : index
    %1 = vector.load %arg3[%c0_2, %c0_3] : memref<4x1xf32, #tpu.memory_space<vmem>>, vector<4x1xf32>
    %2 = vector.shape_cast %1 : vector<4x1xf32> to vector<1x4x1xf32>
    %3 = vector.broadcast %2 : vector<1x4x1xf32> to vector<1x4x128xf32>
    %4 = arith.mulf %0, %3 : vector<1x4x128xf32>
    %cst = arith.constant dense<0.000000e+00> : vector<1x128xf32>
    %5 = vector.multi_reduction <add>, %4, %cst [1] : vector<1x4x128xf32> to vector<1x128xf32>
    %6 = vector.shape_cast %5 : vector<1x128xf32> to vector<1x1x128xf32>
    %c0_4 = arith.constant 0 : index
    %c0_5 = arith.constant 0 : index
    %7 = memref.load %arg4[%c0_4, %c0_5] : memref<1x1xf32, #tpu.memory_space<smem>>
    %8 = vector.broadcast %7 : f32 to vector<1x1x128xf32>
    %9 = arith.addf %6, %8 : vector<1x1x128xf32>
    %10 = arith.negf %9 : vector<1x1x128xf32>
    %11 = math.exp %10 : vector<1x1x128xf32>
    %cst_6 = arith.constant 1.000000e+00 : f32
    %12 = vector.broadcast %cst_6 : f32 to vector<1x1x128xf32>
    %13 = arith.addf %12, %11 : vector<1x1x128xf32>
    %14 = arith.divf %12, %13 : vector<1x1x128xf32>
    %c0_7 = arith.constant 0 : index
    %c0_8 = arith.constant 0 : index
    %c0_9 = arith.constant 0 : index
    %15 = vector.load %arg2[%c0_7, %c0_8, %c0_9] : memref<1x4x128xf32, #tpu.memory_space<vmem>>, vector<1x4x128xf32>
    %16 = vector.broadcast %14 : vector<1x1x128xf32> to vector<1x4x128xf32>
    %17 = arith.mulf %15, %16 : vector<1x4x128xf32>
    %c0_10 = arith.constant 0 : index
    %c0_11 = arith.constant 0 : index
    %c0_12 = arith.constant 0 : index
    %18 = vector.load %arg5[%c0_10, %c0_11, %c0_12] : memref<1x4x128xf32, #tpu.memory_space<vmem>>, vector<1x4x128xf32>
    tpu.vector_store %arg5[%c0_10, %c0_11, %c0_12], %17 {strides = array<i32>} : memref<1x4x128xf32, #tpu.memory_space<vmem>>, vector<1x4x128xf32>,
    return
  }
  func.func @transform_0(%arg0: i32, %arg1: i32) -> (i32, i32, i32) {
    %c0_i32 = arith.constant 0 : i32
    %c0_i32_0 = arith.constant 0 : i32
    return %arg0, %c0_i32, %arg1 : i32, i32, i32
  }
  func.func @transform_1(%arg0: i32, %arg1: i32) -> (i32, i32) {
    %c0_i32 = arith.constant 0 : i32
    %c0_i32_0 = arith.constant 0 : i32
    %c0_i32_1 = arith.constant 0 : i32
    return %c0_i32, %c0_i32_0 : i32, i32
  }
  func.func @transform_2(%arg0: i32, %arg1: i32) -> (i32, i32) {
    %c0_i32 = arith.constant 0 : i32
    %c0_i32_0 = arith.constant 0 : i32
    %c0_i32_1 = arith.constant 0 : i32
    return %c0_i32, %c0_i32_0 : i32, i32
  }
  func.func @transform_3(%arg0: i32, %arg1: i32) -> (i32, i32, i32) {
    %c0_i32 = arith.constant 0 : i32
    %c0_i32_0 = arith.constant 0 : i32
    return %arg0, %c0_i32, %arg1 : i32, i32, i32
  }
}

</mosaic_0001>

<llo_original>
// kernel: tpu_custom_call.1
$region0: #{tpu_custom_call.1}
  #allocation0 [shape = 'u32[]', space=smem, size = 0x4, offset = 0x4, fixed_abs, tag = 'smem constant byte address 0x4 - core index']
  #allocation1 [shape = 'u32[144,128]{1,0:T(1,128)}', space=vmem, size = 0x12000, scoped, tag = 'internal scratch']
  #allocation2 [shape = 'f32[1,1]{1,0:T(1,128)S(6)}', space=smem, size = 0x200, scoped, tag = 'scoped memory for tpu_custom_call.1']
  %s0 = inlined_call_operand.hbm [shape: f32[2,4,256], index: 0, kind: input, shape index: {}]
  %s1 = inlined_call_operand.vmem [shape: f32[4,1], index: 1, kind: input, shape index: {}]
  %s2 = inlined_call_operand.<no memory space> [shape: f32[1,1], index: 2, kind: input, shape index: {}]
  %s3 = inlined_call_operand.hbm [shape: f32[2,4,256], index: 3, kind: output, shape index: {}]
  %s4 = sld [smem:[#allocation0]]
  $region49: #{tpu_custom_call.1} parent=0
    _
  %s6 = ssub.s32 1, %s4
  %s7 = scalar_select 0, %s6, %s4
  %8 = sst [smem:[#allocation2]] %s2
  $region1: #{tpu_custom_call.1} parent=0
    #allocation3 [shape = 'u8[4096]{0}', space=vmem, size = 0x1000, scoped, tag = 'input window, operand 0']
    #allocation4 [shape = 's32[2]{0}', space=sflag, size = 0x8, scoped, tag = 'scoped memory for tpu_custom_call.1']
    #allocation5 [shape = 's32[2]{0}', space=sflag, size = 0x8, scoped, tag = 'scoped memory for tpu_custom_call.1']
    #allocation6 [shape = 'u8[4096]{0}', space=vmem, size = 0x1000, scoped, tag = 'output window, operand 0']
    %9 = vsyncpa [#allocation4], 0
    %s10 = scalar_lea.sflag [#allocation4], 1
    %11 = vsyncpa %s10, 0
    %12 = vsyncpa [#allocation5], 0
    %s13 = scalar_lea.sflag [#allocation5], 1
    %14 = vsyncpa %s13, 0
    loop: start=0, step=1, limit=6
    $region2: #{tpu_custom_call.1} parent=1 // loop_pre_header
      _
    $region3: #{tpu_custom_call.1} parent=1 // loop_header
      %s16 = sphi 0, %s20
      %p17 = scmp.ge.s32.totalorder %s16, 6
      %s23 = sphi 0, %s35
      %s24 = sphi 0, %s31
      %s25 = sphi 0, %s23
      %s26 = sphi 0, %s24
      %s27 = sphi 0, %s25
      %s28 = sphi 0, %s26
      %s40 = sphi 0, %s42
      %s43 = sphi 0, %s40
      %s44 = sphi 0, %s43
      %s60 = sphi 0, %s44
      %s64 = sphi 0, %s64
      %s66 = sphi 0, %s64
      %s67 = sphi 0, %s66
      %s81 = sphi 0, %s67
      %s85 = sphi 0, %s85
      %s87 = sphi 0, %s85
      %s88 = sphi 0, %s87
      %s102 = sphi 0, %s88
      %s110 = sphi 0, %s112
      %s113 = sphi 0, %s110
      %s114 = sphi 0, %s113
      %s130 = sphi 0, %s114
    $region4: #{tpu_custom_call.1} parent=1 // loop_header_branch
      %19 = sbr.rel (%p17) target = $region8
    $region5: #{tpu_custom_call.1} parent=1 // loop_body
      %s21 = ssub.s32 %s16, 1
      %s22 = ssub.s32 %s16, 2
      %s29 = sadd.s32 1, %s24
      %p30 = scmp.ge.s32.totalorder %s29, 2
      %s31 = scalar_select %p30, 0, %s29
      %s32 = sadd.s32 1, %s23
      %s33 = scalar_select %p30, %s32, %s23
      %p34 = scmp.ge.s32.totalorder %s33, 2
      %s35 = scalar_select %p34, 0, %s33
      %s36 = ssub.s32 %s23, %s35
      %s37 = ssub.s32 %s24, %s31
      %s38 = sor.u32 %s36, %s37
      %p39 = scmp.eq.s32.totalorder %s38, 0
      %s41 = sadd.s32 %s40, 1
      %s42 = scalar_select %p39, %s40, %s41
      %p45 = pneg %p39
      %p46 = scmp.eq.s32.totalorder %s16, 3
      %p47 = por %p45, %p46
      %p48 = scmp.ne.s32.totalorder %s40, %s43
      %p49 = scmp.eq.s32.totalorder %s16, 0
      %p50 = por %p48, %p49
      %p51 = scmp.ne.s32.totalorder %s40, %s43
      %p52 = scmp.eq.s32.totalorder %s21, 3
      %p53 = por %p51, %p52
      %p54 = scmp.ne.s32.totalorder %s43, %s44
      %p55 = scmp.eq.s32.totalorder %s21, 0
      %p56 = por %p54, %p55
      %p57 = scmp.ne.s32.totalorder %s43, %s44
      %p58 = scmp.eq.s32.totalorder %s22, 3
      %p59 = por %p57, %p58
      %p61 = scmp.ne.s32.totalorder %s44, %s60
      %p62 = scmp.eq.s32.totalorder %s22, 0
      %p63 = por %p61, %p62
      %s65 = sadd.s32 %s64, 1
      %p68 = scmp.eq.s32.totalorder %s16, 3
      %p69 = scmp.ne.s32.totalorder %s64, %s66
      %p70 = scmp.eq.s32.totalorder %s16, 0
      %p71 = por %p69, %p70
      %p72 = scmp.ne.s32.totalorder %s64, %s66
      %p73 = scmp.eq.s32.totalorder %s21, 3
      %p74 = por %p72, %p73
      %p75 = scmp.ne.s32.totalorder %s66, %s67
      %p76 = scmp.eq.s32.totalorder %s21, 0
      %p77 = por %p75, %p76
      %p78 = scmp.ne.s32.totalorder %s66, %s67
      %p79 = scmp.eq.s32.totalorder %s22, 3
      %p80 = por %p78, %p79
      %p82 = scmp.ne.s32.totalorder %s67, %s81
      %p83 = scmp.eq.s32.totalorder %s22, 0
      %p84 = por %p82, %p83
      %s86 = sadd.s32 %s85, 1
      %p89 = scmp.eq.s32.totalorder %s16, 3
      %p90 = scmp.ne.s32.totalorder %s85, %s87
      %p91 = scmp.eq.s32.totalorder %s16, 0
      %p92 = por %p90, %p91
      %p93 = scmp.ne.s32.totalorder %s85, %s87
      %p94 = scmp.eq.s32.totalorder %s21, 3
      %p95 = por %p93, %p94
      %p96 = scmp.ne.s32.totalorder %s87, %s88
      %p97 = scmp.eq.s32.totalorder %s21, 0
      %p98 = por %p96, %p97
      %p99 = scmp.ne.s32.totalorder %s87, %s88
      %p100 = scmp.eq.s32.totalorder %s22, 3
      %p101 = por %p99, %p100
      %p103 = scmp.ne.s32.totalorder %s88, %s102
      %p104 = scmp.eq.s32.totalorder %s22, 0
      %p105 = por %p103, %p104
      %s106 = ssub.s32 %s23, %s35
      %s107 = ssub.s32 %s24, %s31
      %s108 = sor.u32 %s106, %s107
      %p109 = scmp.eq.s32.totalorder %s108, 0
      %s111 = sadd.s32 %s110, 1
      %s112 = scalar_select %p109, %s110, %s111
      %p115 = pneg %p109
      %p116 = scmp.eq.s32.totalorder %s16, 3
      %p117 = por %p115, %p116
      %p118 = scmp.ne.s32.totalorder %s110, %s113
      %p119 = scmp.eq.s32.totalorder %s16, 0
      %p120 = por %p118, %p119
      %p121 = scmp.ne.s32.totalorder %s110, %s113
      %p122 = scmp.eq.s32.totalorder %s21, 3
      %p123 = por %p121, %p122
      %p124 = scmp.ne.s32.totalorder %s113, %s114
      %p125 = scmp.eq.s32.totalorder %s21, 0
      %p126 = por %p124, %p125
      %p127 = scmp.ne.s32.totalorder %s113, %s114
      %p128 = scmp.eq.s32.totalorder %s22, 3
      %p129 = por %p127, %p128
      %p131 = scmp.ne.s32.totalorder %s114, %s130
      %p132 = scmp.eq.s32.totalorder %s22, 0
      %p133 = por %p131, %p132
      %p134 = scmp.le.s32.totalorder 1, %s16
      %p135 = scmp.lt.s32.totalorder %s16, 5
      %p136 = pnand %p134, %p135
      %p137 = pneg %p136
      // Predicated region
      $region9: #{tpu_custom_call.1} parent=5 // pred_check
        _
      $region10: #{tpu_custom_call.1} parent=5 // pred_check_branch
        %139 = sbr.rel (%p136) target = $region12
      $region11: #{tpu_custom_call.1} parent=5 // pred_region
        %s140 = ssub.s32 %s16, 1
        // Predicated region
        $region13: #{tpu_custom_call.1} parent=11 // pred_check
          %p141 = pneg %p77
        $region14: #{tpu_custom_call.1} parent=11 // pred_check_branch
          %143 = sbr.rel (%p141) target = $region16
        $region15: #{tpu_custom_call.1} parent=11 // pred_region
          _
        $region16: #{tpu_custom_call.1} parent=11 // pred_fallthru
          _
        // Predicated region
        $region17: #{tpu_custom_call.1} parent=11 // pred_check
          %p144 = pneg %p98
        $region18: #{tpu_custom_call.1} parent=11 // pred_check_branch
          %146 = sbr.rel (%p144) target = $region20
        $region19: #{tpu_custom_call.1} parent=11 // pred_region
          _
        $region20: #{tpu_custom_call.1} parent=11 // pred_fallthru
          _
      $region12: #{tpu_custom_call.1} parent=5 // pred_fallthru
        _
      %p147 = scmp.lt.s32.totalorder %s16, 4
      // Predicated region
      $region21: #{tpu_custom_call.1} parent=5 // pred_check
        %p148 = pneg %p147
      $region22: #{tpu_custom_call.1} parent=5 // pred_check_branch
        %150 = sbr.rel (%p148) target = $region24
      $region23: #{tpu_custom_call.1} parent=5 // pred_region
        // Predicated region
        $region25: #{tpu_custom_call.1} parent=23 // pred_check
          %p151 = pneg %p50
        $region26: #{tpu_custom_call.1} parent=23 // pred_check_branch
          %153 = sbr.rel (%p151) target = $region28
        $region27: #{tpu_custom_call.1} parent=23 // pred_region
          %s154 = sand.u32 %s40, 1
          %s155 = scalar_lea.sflag [#allocation4], %s154
          %s156 = sand.u32 %s40, 1
          %s157 = smul.addr %s156, 4
          %s158 = scalar_lea.vmem [#allocation3], %s157
          %s160 = ssub.s32 64, 64
          %161 = vsyncadd %s155, %s160
          %s162 = smul.addr %s23, 2
          %s163 = sadd.s32 %s24, %s162
          %s164 = smul.addr %s163, 64
          %s165 = scalar_lea.hbm %s0, %s164
          %s167 = sshll.u32 %s158, 4
          %s168 = int_to_ptr.vmem [resolvable:$true] %s167
          %170 = dma.hbm_to_vmem [thread:$0]  %s165, 64, %s168, %s155
        $region28: #{tpu_custom_call.1} parent=23 // pred_fallthru
          _
      $region24: #{tpu_custom_call.1} parent=5 // pred_fallthru
        _
      %p171 = scmp.le.s32.totalorder 1, %s16
      %p172 = scmp.lt.s32.totalorder %s16, 5
      %p173 = pnand %p171, %p172
      %p174 = pneg %p173
      // Predicated region
      $region29: #{tpu_custom_call.1} parent=5 // pred_check
        _
      $region30: #{tpu_custom_call.1} parent=5 // pred_check_branch
        %176 = sbr.rel (%p173) target = $region32
      $region31: #{tpu_custom_call.1} parent=5 // pred_region
        %s177 = ssub.s32 %s16, 1
        %s178 = sand.u32 %s43, 1
        %s179 = scalar_lea.sflag [#allocation4], %s178
        %s180 = sand.u32 %s43, 1
        %s181 = smul.addr %s180, 4
        %s182 = scalar_lea.vmem [#allocation3], %s181
        // Predicated region
        $region33: #{tpu_custom_call.1} parent=31 // pred_check
          %p183 = pneg %p56
        $region34: #{tpu_custom_call.1} parent=31 // pred_check_branch
          %185 = sbr.rel (%p183) target = $region36
        $region35: #{tpu_custom_call.1} parent=31 // pred_region
          %186 = dma.done %s179, 64
        $region36: #{tpu_custom_call.1} parent=31 // pred_fallthru
          _
        %s187 = sand.u32 %s43, 1
        %s188 = scalar_lea.sflag [#allocation4], %s187
        %s189 = sand.u32 %s43, 1
        %s190 = smul.addr %s189, 4
        %s191 = scalar_lea.vmem [#allocation3], %s190
        %p192 = pneg %p56
        %p193 = pneg %p53
        %p194 = pneg %p77
        %p195 = pneg %p74
        %p196 = pneg %p98
        %p197 = pneg %p95
        %p198 = pneg %p126
        %p199 = pneg %p123
        %s200 = sand.u32 %s113, 1
        %s201 = scalar_lea.sflag [#allocation5], %s200
        %s202 = sand.u32 %s113, 1
        %s203 = smul.addr %s202, 4
        %s204 = scalar_lea.vmem [#allocation6], %s203
        %v205 = vld [vmem:[%s182] sm:$0xf]
        %v206 = vld [vmem:[%s1] sm:$0xf]
        %208 = vset.pattern.permute.xlu0 0
        %209 = vperm.xlu0 %208, %v206
        %v210 = vpop.permute.xlu0 %209
        %v212 = vmul.f32 %v205, %v210
        %vm213 = vcmask 1043456
        %v214 = vsel %vm213, %v212, 0.0
        %v215 = vrot.slane %v214, 4
        %v216 = vadd.f32 %v214, %v215
        %v217 = vrot.slane %v216, 2
        %v218 = vadd.f32 %v216, %v217
        %v219 = vrot.slane %v218, 1
        %v220 = vadd.f32 %v218, %v219
        %s221 = sld [smem:[#allocation2]]
        %v222 = vstv %s221
        %v223 = vadd.f32 %v220, %v222
        %v224 = vxor.u32 %v223, 2147483648
        %v225 = vmul.f32 %v224, 1.442695
        %v226 = vpow.pop %v225
        %v227 = vadd.f32 %v226, 1.0
        %v228 = vrcp.pop %v227
        %v229 = vmul.f32 1.0, %v228
        %v230 = vmul.f32 %v205, %v229
        %231 = vst [vmem:[%s204] sm:$0xf] %v230
        %s232 = sand.u32 %s113, 1
        %s233 = scalar_lea.sflag [#allocation5], %s232
        %s234 = sand.u32 %s113, 1
        %s235 = smul.addr %s234, 4
        %s236 = scalar_lea.vmem [#allocation6], %s235
        // Predicated region
        $region37: #{tpu_custom_call.1} parent=31 // pred_check
          %p237 = pneg %p123
        $region38: #{tpu_custom_call.1} parent=31 // pred_check_branch
          %239 = sbr.rel (%p237) target = $region40
        $region39: #{tpu_custom_call.1} parent=31 // pred_region
          %s241 = ssub.s32 64, 64
          %242 = vsyncadd %s233, %s241
          %s243 = smul.addr %s25, 2
          %s244 = sadd.s32 %s26, %s243
          %s245 = smul.addr %s244, 64
          %s246 = scalar_lea.hbm %s3, %s245
          %s248 = sshll.u32 %s236, 4
          %s249 = int_to_ptr.vmem [resolvable:$true] %s248
          %251 = dma.vmem_to_hbm [thread:$0]  %s249, 64, %s246, %s233
        $region40: #{tpu_custom_call.1} parent=31 // pred_fallthru
          _
      $region32: #{tpu_custom_call.1} parent=5 // pred_fallthru
        _
      %p252 = scmp.le.s32.totalorder 2, %s16
      // Predicated region
      $region41: #{tpu_custom_call.1} parent=5 // pred_check
        %p253 = pneg %p252
      $region42: #{tpu_custom_call.1} parent=5 // pred_check_branch
        %255 = sbr.rel (%p253) target = $region44
      $region43: #{tpu_custom_call.1} parent=5 // pred_region
        %s256 = ssub.s32 %s16, 2
        // Predicated region
        $region45: #{tpu_custom_call.1} parent=43 // pred_check
          %p257 = pneg %p129
        $region46: #{tpu_custom_call.1} parent=43 // pred_check_branch
          %259 = sbr.rel (%p257) target = $region48
        $region47: #{tpu_custom_call.1} parent=43 // pred_region
          %s260 = sand.u32 %s114, 1
          %s261 = scalar_lea.sflag [#allocation5], %s260
          %s262 = sand.u32 %s114, 1
          %s263 = smul.addr %s262, 4
          %s264 = scalar_lea.vmem [#allocation6], %s263
          %265 = dma.done %s261, 64
        $region48: #{tpu_custom_call.1} parent=43 // pred_fallthru
          _
      $region44: #{tpu_custom_call.1} parent=5 // pred_fallthru
        _
    $region6: #{tpu_custom_call.1} parent=1 // loop_footer
      %s20 = sadd.s32 1, %s16
    $region7: #{tpu_custom_call.1} parent=1 // loop_footer_branch
      %15 = sbr.rel target = $region3
    $region8: #{tpu_custom_call.1} parent=1 // loop_exit
      _
    %266 = vsyncpa [#allocation4], 1
    %s267 = scalar_lea.sflag [#allocation4], 1
    %268 = vsyncpa %s267, 1
    %269 = vsyncpa [#allocation5], 1
    %s270 = scalar_lea.sflag [#allocation5], 1
    %271 = vsyncpa %s270, 1

</llo_original>
